<compile_context>
chip_gen: v5e
topology: v5e:2x2
jax: 0.10.0
libtpu: 0.0.40
codegen_flags: <defaults>
</compile_context>

<pallas_src>
import jax
import jax.numpy as jnp
import numpy as np
from jax.experimental import pallas as pl
from jax.experimental.pallas import tpu as pltpu

HIDDEN = 128   # hidden_size (spec sanity check: output [1,1,256], hidden [2,1,128])
VOCAB = 16     # input_size (vocabulary)


def _bigru_kernel(tok_ref, emb_ref, hid_ref, wih_ref, whh_ref, bias_ref, out_ref):
    H = out_ref.shape[-1] // 2

    tok = tok_ref[0]
    x = emb_ref[pl.ds(tok, 1), :]        # (1, H)  embedded input token
    hid = hid_ref[...]                   # (1, 2H) = [h_fwd | h_bwd]

    # Input / hidden projections for BOTH directions, one MXU push each.
    gi = jnp.dot(x, wih_ref[...], preferred_element_type=jnp.float32) + bias_ref[0:1, :]    # (1, 6H)
    gh = jnp.dot(hid, whh_ref[...], preferred_element_type=jnp.float32) + bias_ref[1:2, :]  # (1, 6H)

    def gru_cell(gi_d, gh_d, h_d):
        # PyTorch nn.GRU gate order: r, z, n
        r = jax.nn.sigmoid(gi_d[:, 0:H] + gh_d[:, 0:H])
        z = jax.nn.sigmoid(gi_d[:, H:2 * H] + gh_d[:, H:2 * H])
        n = jnp.tanh(gi_d[:, 2 * H:3 * H] + r * gh_d[:, 2 * H:3 * H])
        return (1.0 - z) * n + z * h_d

    # Forward direction -> lanes [0, H), backward direction -> lanes [H, 2H).
    out_ref[:, 0:H] = gru_cell(gi[:, 0:3 * H], gh[:, 0:3 * H], hid[:, 0:H])
    out_ref[:, H:2 * H] = gru_cell(gi[:, 3 * H:6 * H], gh[:, 3 * H:6 * H], hid[:, H:2 * H])


@jax.jit
def bigru_step(tok, emb_table, hid_cat, w_ih_t, w_hh_blk, bias):
    H = emb_table.shape[1]
    vmem = pl.BlockSpec(memory_space=pltpu.MemorySpace.VMEM)
    smem = pl.BlockSpec(memory_space=pltpu.MemorySpace.SMEM)
    return pl.pallas_call(
        _bigru_kernel,
        out_shape=jax.ShapeDtypeStruct((1, 2 * H), jnp.float32),
        in_specs=[smem, vmem, vmem, vmem, vmem, vmem],
        out_specs=vmem,
    )(tok, emb_table, hid_cat, w_ih_t, w_hh_blk, bias)


def init_params(key, hidden, vocab):
    ks = jax.random.split(key, 9)
    s = 1.0 / np.sqrt(hidden)
    u = lambda k, shape: jax.random.uniform(k, shape, jnp.float32, -s, s)
    return {
        "embedding": jax.random.normal(ks[0], (vocab, hidden), jnp.float32),   # nn.Embedding
        # forward direction (gru.weight_ih_l0 etc., gate order [r; z; n])
        "w_ih_f": u(ks[1], (3 * hidden, hidden)),
        "w_hh_f": u(ks[2], (3 * hidden, hidden)),
        "b_ih_f": u(ks[3], (3 * hidden,)),
        "b_hh_f": u(ks[4], (3 * hidden,)),
        # backward direction (gru.weight_ih_l0_reverse etc.)
        "w_ih_b": u(ks[5], (3 * hidden, hidden)),
        "w_hh_b": u(ks[6], (3 * hidden, hidden)),
        "b_ih_b": u(ks[7], (3 * hidden,)),
        "b_hh_b": u(ks[8], (3 * hidden,)),
    }


def pack_params(p, H):
    """One-time packing at init (not per call): pre-transposed, fused weights."""
    w_ih_t = jnp.concatenate([p["w_ih_f"].T, p["w_ih_b"].T], axis=1)           # (H, 6H)
    z = jnp.zeros((H, 3 * H), jnp.float32)
    w_hh_blk = jnp.concatenate(
        [jnp.concatenate([p["w_hh_f"].T, z], axis=1),
         jnp.concatenate([z, p["w_hh_b"].T], axis=1)], axis=0)                  # (2H, 6H)
    bias = jnp.stack(
        [jnp.concatenate([p["b_ih_f"], p["b_ih_b"]]),
         jnp.concatenate([p["b_hh_f"], p["b_hh_b"]])], axis=0)                  # (2, 6H)
    # NOTE: weights could be stored as bf16 (half the HBM->VMEM bytes) with the
    # gate math kept in f32; kept f32 here since the full footprint is ~1.5 MB.
    return w_ih_t, w_hh_blk, bias


def reference_forward(token, hidden, p):
    """Pure-JAX mirror of the PyTorch forward (nn.GRU, bidirectional, seq_len=1)."""
    H = hidden.shape[-1]
    x = p["embedding"][token][None, :]                               # (1, H)

    def gru_cell(x, h, w_ih, w_hh, b_ih, b_hh):
        gi = x @ w_ih.T + b_ih                                       # (1, 3H)
        gh = h @ w_hh.T + b_hh                                       # (1, 3H)
        r = jax.nn.sigmoid(gi[:, :H] + gh[:, :H])
        zg = jax.nn.sigmoid(gi[:, H:2 * H] + gh[:, H:2 * H])
        n = jnp.tanh(gi[:, 2 * H:] + r * gh[:, 2 * H:])
        return (1.0 - zg) * n + zg * h

    h_f = gru_cell(x, hidden[0], p["w_ih_f"], p["w_hh_f"], p["b_ih_f"], p["b_hh_f"])
    h_b = gru_cell(x, hidden[1], p["w_ih_b"], p["w_hh_b"], p["b_ih_b"], p["b_hh_b"])
    output = jnp.concatenate([h_f, h_b], axis=1)[None]               # (1, 1, 2H)
    hidden_new = jnp.stack([h_f, h_b], axis=0)                       # (2, 1, H)
    return output, hidden_new


if __name__ == "__main__":
    key = jax.random.PRNGKey(0)
    pkey, hkey = jax.random.split(key)
    params = init_params(pkey, HIDDEN, VOCAB)
    w_ih_t, w_hh_blk, bias = pack_params(params, HIDDEN)

    # Inputs matching the PyTorch module: input (1,1) index tensor, hidden (2,1,H).
    input_token = jnp.array([[3]], dtype=jnp.int32)
    hidden0 = jax.random.normal(hkey, (2, 1, HIDDEN), jnp.float32)   # initHidden() would be zeros

    # Kernel-friendly views: token -> SMEM scalar, hidden (2,1,H) -> (1,2H) lane-dense row.
    tok = input_token.reshape(-1).astype(jnp.int32)                  # (1,)
    hid_cat = hidden0.reshape(1, 2 * HIDDEN)                         # [h_fwd | h_bwd]

    out = bigru_step(tok, params["embedding"], hid_cat, w_ih_t, w_hh_blk, bias)
    jax.block_until_ready(out)

    # Reshape to the PyTorch return convention.
    output = out[None]                          # (1, 1, 2H)   -> [1, 1, 256]
    hidden_out = out.reshape(2, 1, HIDDEN)      # (2, 1, H)    -> [2, 1, 128]

    assert output.shape == (1, 1, 2 * HIDDEN)
    assert hidden_out.shape == (2, 1, HIDDEN)

    # Cross-check against the pure-JAX reference.  Tolerance covers the
    # difference between the MXU f32 path inside the kernel and XLA's default
    # matmul precision for the reference on real TPUs.
    r_out, r_hid = reference_forward(int(input_token[0, 0]), hidden0, params)
    np.testing.assert_allclose(np.asarray(output), np.asarray(r_out), atol=2e-3, rtol=2e-3)
    np.testing.assert_allclose(np.asarray(hidden_out), np.asarray(r_hid), atol=2e-3, rtol=2e-3)

    print("KERNEL_OK")
</pallas_src>

<mosaic_0001>
module attributes {stable_mosaic.version = 11 : i64} {
  func.func @_bigru_kernel(%arg0: memref<1xi32, #tpu.memory_space<smem>>, %arg1: memref<16x128xf32, #tpu.memory_space<vmem>>, %arg2: memref<1x256xf32, #tpu.memory_space<vmem>>, %arg3: memref<128x768xf32, #tpu.memory_space<vmem>>, %arg4: memref<256x768xf32, #tpu.memory_space<vmem>>, %arg5: memref<2x768xf32, #tpu.memory_space<vmem>>, %arg6: memref<1x256xf32, #tpu.memory_space<vmem>>) attributes {dimension_semantics = [], scalar_prefetch = 0 : i64, scratch_operands = 0 : i64, tpu.core_type = #tpu.core_type<tc>} {
    %c0 = arith.constant 0 : index
    %0 = memref.load %arg0[%c0] : memref<1xi32, #tpu.memory_space<smem>>
    %1 = arith.index_cast %0 : i32 to index
    %c0_0 = arith.constant 0 : index
    %2 = vector.load %arg1[%1, %c0_0] : memref<16x128xf32, #tpu.memory_space<vmem>>, vector<1x128xf32>
    %c0_1 = arith.constant 0 : index
    %c0_2 = arith.constant 0 : index
    %3 = vector.load %arg2[%c0_1, %c0_2] : memref<1x256xf32, #tpu.memory_space<vmem>>, vector<1x256xf32>
    %c0_3 = arith.constant 0 : index
    %c0_4 = arith.constant 0 : index
    %4 = vector.load %arg3[%c0_3, %c0_4] : memref<128x768xf32, #tpu.memory_space<vmem>>, vector<128x768xf32>
    %cst = arith.constant dense<0.000000e+00> : vector<1x768xf32>
    %5 = tpu.matmul %2, %4, %cst {dimension_numbers = #tpu.dot_dimension_numbers<[1], [0], [0], [1], [0, 0, 1, 1], [], []>} : vector<1x128xf32>, vector<128x768xf32>, vector<1x768xf32> -> vector<1x768xf32>
    %c0_5 = arith.constant 0 : index
    %c0_6 = arith.constant 0 : index
    %6 = vector.load %arg5[%c0_5, %c0_6] : memref<2x768xf32, #tpu.memory_space<vmem>>, vector<1x768xf32>
    %7 = arith.addf %5, %6 : vector<1x768xf32>
    %c0_7 = arith.constant 0 : index
    %c0_8 = arith.constant 0 : index
    %8 = vector.load %arg4[%c0_7, %c0_8] : memref<256x768xf32, #tpu.memory_space<vmem>>, vector<256x768xf32>
    %cst_9 = arith.constant dense<0.000000e+00> : vector<1x768xf32>
    %9 = tpu.matmul %3, %8, %cst_9 {dimension_numbers = #tpu.dot_dimension_numbers<[1], [0], [0], [1], [0, 0, 1, 1], [], []>} : vector<1x256xf32>, vector<256x768xf32>, vector<1x768xf32> -> vector<1x768xf32>
    %c1 = arith.constant 1 : index
    %c0_10 = arith.constant 0 : index
    %10 = vector.load %arg5[%c1, %c0_10] : memref<2x768xf32, #tpu.memory_space<vmem>>, vector<1x768xf32>
    %11 = arith.addf %9, %10 : vector<1x768xf32>
    %12 = vector.extract_strided_slice %7 {offsets = [0, 0], sizes = [1, 384], strides = [1, 1]} : vector<1x768xf32> to vector<1x384xf32>
    %13 = vector.extract_strided_slice %11 {offsets = [0, 0], sizes = [1, 384], strides = [1, 1]} : vector<1x768xf32> to vector<1x384xf32>
    %14 = vector.extract_strided_slice %3 {offsets = [0, 0], sizes = [1, 128], strides = [1, 1]} : vector<1x256xf32> to vector<1x128xf32>
    %15 = vector.extract_strided_slice %12 {offsets = [0, 0], sizes = [1, 128], strides = [1, 1]} : vector<1x384xf32> to vector<1x128xf32>
    %16 = vector.extract_strided_slice %13 {offsets = [0, 0], sizes = [1, 128], strides = [1, 1]} : vector<1x384xf32> to vector<1x128xf32>
    %17 = arith.addf %15, %16 : vector<1x128xf32>
    %18 = arith.negf %17 : vector<1x128xf32>
    %19 = math.exp %18 : vector<1x128xf32>
    %cst_11 = arith.constant 1.000000e+00 : f32
    %20 = vector.broadcast %cst_11 : f32 to vector<1x128xf32>
    %21 = arith.addf %20, %19 : vector<1x128xf32>
    %22 = arith.divf %20, %21 : vector<1x128xf32>
    %23 = vector.extract_strided_slice %12 {offsets = [0, 128], sizes = [1, 128], strides = [1, 1]} : vector<1x384xf32> to vector<1x128xf32>
    %24 = vector.extract_strided_slice %13 {offsets = [0, 128], sizes = [1, 128], strides = [1, 1]} : vector<1x384xf32> to vector<1x128xf32>
    %25 = arith.addf %23, %24 : vector<1x128xf32>
    %26 = arith.negf %25 : vector<1x128xf32>
    %27 = math.exp %26 : vector<1x128xf32>
    %cst_12 = arith.constant 1.000000e+00 : f32
    %28 = vector.broadcast %cst_12 : f32 to vector<1x128xf32>
    %29 = arith.addf %28, %27 : vector<1x128xf32>
    %30 = arith.divf %28, %29 : vector<1x128xf32>
    %31 = vector.extract_strided_slice %12 {offsets = [0, 256], sizes = [1, 128], strides = [1, 1]} : vector<1x384xf32> to vector<1x128xf32>
    %32 = vector.extract_strided_slice %13 {offsets = [0, 256], sizes = [1, 128], strides = [1, 1]} : vector<1x384xf32> to vector<1x128xf32>
    %33 = arith.mulf %22, %32 : vector<1x128xf32>
    %34 = arith.addf %31, %33 : vector<1x128xf32>
    %35 = math.tanh %34 : vector<1x128xf32>
    %cst_13 = arith.constant 1.000000e+00 : f32
    %36 = vector.broadcast %cst_13 : f32 to vector<1x128xf32>
    %37 = arith.subf %36, %30 : vector<1x128xf32>
    %38 = arith.mulf %37, %35 : vector<1x128xf32>
    %39 = arith.mulf %30, %14 : vector<1x128xf32>
    %40 = arith.addf %38, %39 : vector<1x128xf32>
    %c0_14 = arith.constant 0 : index
    %c0_15 = arith.constant 0 : index
    %41 = vector.load %arg6[%c0_14, %c0_15] : memref<1x256xf32, #tpu.memory_space<vmem>>, vector<1x128xf32>
    tpu.vector_store %arg6[%c0_14, %c0_15], %40 {strides = array<i32>} : memref<1x256xf32, #tpu.memory_space<vmem>>, vector<1x128xf32>,
    %42 = vector.extract_strided_slice %7 {offsets = [0, 384], sizes = [1, 384], strides = [1, 1]} : vector<1x768xf32> to vector<1x384xf32>
    %43 = vector.extract_strided_slice %11 {offsets = [0, 384], sizes = [1, 384], strides = [1, 1]} : vector<1x768xf32> to vector<1x384xf32>
    %44 = vector.extract_strided_slice %3 {offsets = [0, 128], sizes = [1, 128], strides = [1, 1]} : vector<1x256xf32> to vector<1x128xf32>
    %45 = vector.extract_strided_slice %42 {offsets = [0, 0], sizes = [1, 128], strides = [1, 1]} : vector<1x384xf32> to vector<1x128xf32>
    %46 = vector.extract_strided_slice %43 {offsets = [0, 0], sizes = [1, 128], strides = [1, 1]} : vector<1x384xf32> to vector<1x128xf32>
    %47 = arith.addf %45, %46 : vector<1x128xf32>
    %48 = arith.negf %47 : vector<1x128xf32>
    %49 = math.exp %48 : vector<1x128xf32>
    %cst_16 = arith.constant 1.000000e+00 : f32
    %50 = vector.broadcast %cst_16 : f32 to vector<1x128xf32>
    %51 = arith.addf %50, %49 : vector<1x128xf32>
    %52 = arith.divf %50, %51 : vector<1x128xf32>
    %53 = vector.extract_strided_slice %42 {offsets = [0, 128], sizes = [1, 128], strides = [1, 1]} : vector<1x384xf32> to vector<1x128xf32>
    %54 = vector.extract_strided_slice %43 {offsets = [0, 128], sizes = [1, 128], strides = [1, 1]} : vector<1x384xf32> to vector<1x128xf32>
    %55 = arith.addf %53, %54 : vector<1x128xf32>
    %56 = arith.negf %55 : vector<1x128xf32>
    %57 = math.exp %56 : vector<1x128xf32>
    %cst_17 = arith.constant 1.000000e+00 : f32
    %58 = vector.broadcast %cst_17 : f32 to vector<1x128xf32>
    %59 = arith.addf %58, %57 : vector<1x128xf32>
    %60 = arith.divf %58, %59 : vector<1x128xf32>
    %61 = vector.extract_strided_slice %42 {offsets = [0, 256], sizes = [1, 128], strides = [1, 1]} : vector<1x384xf32> to vector<1x128xf32>
    %62 = vector.extract_strided_slice %43 {offsets = [0, 256], sizes = [1, 128], strides = [1, 1]} : vector<1x384xf32> to vector<1x128xf32>
    %63 = arith.mulf %52, %62 : vector<1x128xf32>
    %64 = arith.addf %61, %63 : vector<1x128xf32>
    %65 = math.tanh %64 : vector<1x128xf32>
    %cst_18 = arith.constant 1.000000e+00 : f32
    %66 = vector.broadcast %cst_18 : f32 to vector<1x128xf32>
    %67 = arith.subf %66, %60 : vector<1x128xf32>
    %68 = arith.mulf %67, %65 : vector<1x128xf32>
    %69 = arith.mulf %60, %44 : vector<1x128xf32>
    %70 = arith.addf %68, %69 : vector<1x128xf32>
    %c0_19 = arith.constant 0 : index
    %c128 = arith.constant 128 : index
    %71 = vector.load %arg6[%c0_19, %c128] : memref<1x256xf32, #tpu.memory_space<vmem>>, vector<1x128xf32>
    tpu.vector_store %arg6[%c0_19, %c128], %70 {strides = array<i32>} : memref<1x256xf32, #tpu.memory_space<vmem>>, vector<1x128xf32>,
    return
  }
}

</mosaic_0001>

<llo_original>
// kernel: bigru_step.1
$region0: #{bigru_step.1}
  #allocation0 [shape = 'u32[]', space=smem, size = 0x4, offset = 0x4, fixed_abs, tag = 'smem constant byte address 0x4 - core index']
  #allocation1 [shape = 'u32[72,128]{1,0:T(1,128)}', space=vmem, size = 0x9000, scoped, tag = 'internal scratch']
  #allocation2 [shape = 's32[1]{0:T(128)S(6)}', space=smem, size = 0x200, scoped, tag = 'scoped memory for bigru_step.1']
  %s0 = inlined_call_operand.<no memory space> [shape: s32[1], index: 0, kind: input, shape index: {}]
  %s1 = inlined_call_operand.hbm [shape: f32[16,128], index: 1, kind: input, shape index: {}]
  %s2 = inlined_call_operand.vmem [shape: f32[1,256], index: 2, kind: input, shape index: {}]
  %s3 = inlined_call_operand.hbm [shape: f32[128,768], index: 3, kind: input, shape index: {}]
  %s4 = inlined_call_operand.hbm [shape: f32[256,768], index: 4, kind: input, shape index: {}]
  %s5 = inlined_call_operand.hbm [shape: f32[2,768], index: 5, kind: input, shape index: {}]
  %s6 = inlined_call_operand.hbm [shape: f32[1,256], index: 6, kind: output, shape index: {}]
  %s7 = sld [smem:[#allocation0]]
  $region50: #{bigru_step.1} parent=0
    _
  %s9 = ssub.s32 1, %s7
  %s10 = scalar_select 0, %s9, %s7
  %11 = sst [smem:[#allocation2]] %s0
  $region1: #{bigru_step.1} parent=0
    #allocation3 [shape = 'u8[8192]{0}', space=vmem, size = 0x2000, scoped, tag = 'input window, operand 1, single buffered']
    #allocation4 [shape = 's32[1]{0}', space=sflag, size = 0x4, scoped, tag = 'scoped memory for bigru_step.1']
    #allocation5 [shape = 's32[1]{0}', space=sflag, size = 0x4, scoped, tag = 'scoped memory for bigru_step.1']
    #allocation6 [shape = 'u8[393216]{0}', space=vmem, size = 0x60000, scoped, tag = 'input window, operand 3, single buffered']
    #allocation7 [shape = 's32[1]{0}', space=sflag, size = 0x4, scoped, tag = 'scoped memory for bigru_step.1']
    #allocation8 [shape = 'u8[786432]{0}', space=vmem, size = 0xc0000, scoped, tag = 'input window, operand 4, single buffered']
    #allocation9 [shape = 'u8[6144]{0}', space=vmem, size = 0x1800, scoped, tag = 'input window, operand 5, single buffered']
    #allocation10 [shape = 's32[1]{0}', space=sflag, size = 0x4, scoped, tag = 'scoped memory for bigru_step.1']
    #allocation11 [shape = 'u8[1024]{0}', space=vmem, size = 0x400, scoped, tag = 'output window, operand 0, single buffered']
    %12 = vsyncpa [#allocation4], 0
    %13 = vsyncpa [#allocation7], 0
    %14 = vsyncpa [#allocation10], 0
    %15 = vsyncpa [#allocation5], 0
    // Predicated region
    $region2: #{bigru_step.1} parent=1 // pred_check
      _
    $region3: #{bigru_step.1} parent=1 // pred_check_branch
      %17 = sbr.rel (0) target = $region5
    $region4: #{bigru_step.1} parent=1 // pred_region
      _
    $region5: #{bigru_step.1} parent=1 // pred_fallthru
      _
    // Predicated region
    $region6: #{bigru_step.1} parent=1 // pred_check
      _
    $region7: #{bigru_step.1} parent=1 // pred_check_branch
      %19 = sbr.rel (0) target = $region9
    $region8: #{bigru_step.1} parent=1 // pred_region
      %21 = vsyncadd [#allocation4], 0
      %s22 = sshll.u32 %s1, 4
      %s23 = int_to_ptr.hbm [resolvable:$true] %s22
      %s24 = sshll.u32 [#allocation3], 4
      %s25 = int_to_ptr.vmem [resolvable:$true] %s24
      %30 = dma.hbm_to_vmem [thread:$0]  %s23, 256, %s25, [#allocation4], 128, 128, 8
    $region9: #{bigru_step.1} parent=1 // pred_fallthru
      _
    // Predicated region
    $region10: #{bigru_step.1} parent=1 // pred_check
      _
    $region11: #{bigru_step.1} parent=1 // pred_check_branch
      %32 = sbr.rel (0) target = $region13
    $region12: #{bigru_step.1} parent=1 // pred_region
      _
    $region13: #{bigru_step.1} parent=1 // pred_fallthru
      _
    // Predicated region
    $region14: #{bigru_step.1} parent=1 // pred_check
      _
    $region15: #{bigru_step.1} parent=1 // pred_check_branch
      %34 = sbr.rel (0) target = $region17
    $region16: #{bigru_step.1} parent=1 // pred_region
      %36 = vsyncadd [#allocation7], 0
      %s37 = sshll.u32 %s3, 4
      %s38 = int_to_ptr.hbm [resolvable:$true] %s37
      %s39 = sshll.u32 [#allocation6], 4
      %s40 = int_to_ptr.vmem [resolvable:$true] %s39
      %45 = dma.hbm_to_vmem [thread:$0]  %s38, 12288, %s40, [#allocation7], 768, 768, 48
    $region17: #{bigru_step.1} parent=1 // pred_fallthru
      _
    // Predicated region
    $region18: #{bigru_step.1} parent=1 // pred_check
      _
    $region19: #{bigru_step.1} parent=1 // pred_check_branch
      %47 = sbr.rel (0) target = $region21
    $region20: #{bigru_step.1} parent=1 // pred_region
      %49 = vsyncadd [#allocation7], 0
      %s50 = sshll.u32 %s4, 4
      %s51 = int_to_ptr.hbm [resolvable:$true] %s50
      %s52 = sshll.u32 [#allocation8], 4
      %s53 = int_to_ptr.vmem [resolvable:$true] %s52
      %58 = dma.hbm_to_vmem [thread:$0]  %s51, 24576, %s53, [#allocation7], 768, 768, 48
    $region21: #{bigru_step.1} parent=1 // pred_fallthru
      _
    // Predicated region
    $region22: #{bigru_step.1} parent=1 // pred_check
      _
    $region23: #{bigru_step.1} parent=1 // pred_check_branch
      %60 = sbr.rel (0) target = $region25
    $region24: #{bigru_step.1} parent=1 // pred_region
      %62 = vsyncadd [#allocation10], 0
      %s64 = sshll.u32 %s5, 4
      %s65 = int_to_ptr.hbm [resolvable:$true] %s64
      %s66 = sshll.u32 [#allocation9], 4
      %s67 = int_to_ptr.vmem [resolvable:$true] %s66
      %69 = dma.hbm_to_vmem [thread:$0]  %s65, 192, %s67, [#allocation10]
    $region25: #{bigru_step.1} parent=1 // pred_fallthru
      _
    // Predicated region
    $region26: #{bigru_step.1} parent=1 // pred_check
      _
    $region27: #{bigru_step.1} parent=1 // pred_check_branch
      %71 = sbr.rel (0) target = $region29
    $region28: #{bigru_step.1} parent=1 // pred_region
      %73 = dma.done [#allocation4], 256
    $region29: #{bigru_step.1} parent=1 // pred_fallthru
      _
    // Predicated region
    $region30: #{bigru_step.1} parent=1 // pred_check
      _
    $region31: #{bigru_step.1} parent=1 // pred_check_branch
      %75 = sbr.rel (0) target = $region33
    $region32: #{bigru_step.1} parent=1 // pred_region
      %77 = dma.done [#allocation7], 12288
    $region33: #{bigru_step.1} parent=1 // pred_fallthru
      _
    // Predicated region
    $region34: #{bigru_step.1} parent=1 // pred_check
      _
    $region35: #{bigru_step.1} parent=1 // pred_check_branch
      %79 = sbr.rel (0) target = $region37
    $region36: #{bigru_step.1} parent=1 // pred_region
      %81 = dma.done [#allocation7], 24576
    $region37: #{bigru_step.1} parent=1 // pred_fallthru
      _
    // Predicated region
    $region38: #{bigru_step.1} parent=1 // pred_check
      _
    $region39: #{bigru_step.1} parent=1 // pred_check_branch
      %83 = sbr.rel (0) target = $region41
    $region40: #{bigru_step.1} parent=1 // pred_region
      %85 = dma.done [#allocation10], 192
    $region41: #{bigru_step.1} parent=1 // pred_fallthru
      _
    %s86 = sld [smem:[#allocation2]]
    %s87 = scalar_lea.vmem [#allocation3], %s86
    %v88 = vld [vmem:[%s87] sm:$0x1]
    %v89 = vld [vmem:[%s2] sm:$0x3]
    %v90 = vld [vmem:[#allocation6] sm:$0xff]
    %v91 = vld [vmem:[#allocation6 + $0x8] sm:$0xff]
    %v92 = vld [vmem:[#allocation6 + $0x10] sm:$0xff]
    %v93 = vld [vmem:[#allocation6 + $0x18] sm:$0xff]
    %v94 = vld [vmem:[#allocation6 + $0x20] sm:$0xff]
    %v95 = vld [vmem:[#allocation6 + $0x28] sm:$0xff]
    %v96 = vld [vmem:[#allocation6 + $0x30] sm:$0xff]
    %v97 = vld [vmem:[#allocation6 + $0x38] sm:$0xff]
    %v98 = vld [vmem:[#allocation6 + $0x40] sm:$0xff]
    %v99 = vld [vmem:[#allocation6 + $0x48] sm:$0xff]
    %v100 = vld [vmem:[#allocation6 + $0x50] sm:$0xff]
    %v101 = vld [vmem:[#allocation6 + $0x58] sm:$0xff]
    %v102 = vld [vmem:[#allocation6 + $0x60] sm:$0xff]
    %v103 = vld [vmem:[#allocation6 + $0x68] sm:$0xff]
    %v104 = vld [vmem:[#allocation6 + $0x70] sm:$0xff]
    %v105 = vld [vmem:[#allocation6 + $0x78] sm:$0xff]
    %v106 = vld [vmem:[#allocation6 + $0x80] sm:$0xff]
    %v107 = vld [vmem:[#allocation6 + $0x88] sm:$0xff]
    %v108 = vld [vmem:[#allocation6 + $0x90] sm:$0xff]
    %v109 = vld [vmem:[#allocation6 + $0x98] sm:$0xff]
    %v110 = vld [vmem:[#allocation6 + $0xa0] sm:$0xff]
    %v111 = vld [vmem:[#allocation6 + $0xa8] sm:$0xff]
    %v112 = vld [vmem:[#allocation6 + $0xb0] sm:$0xff]
    %v113 = vld [vmem:[#allocation6 + $0xb8] sm:$0xff]
    %v114 = vld [vmem:[#allocation6 + $0xc0] sm:$0xff]
    %v115 = vld [vmem:[#allocation6 + $0xc8] sm:$0xff]
    %v116 = vld [vmem:[#allocation6 + $0xd0] sm:$0xff]
    %v117 = vld [vmem:[#allocation6 + $0xd8] sm:$0xff]
    %v118 = vld [vmem:[#allocation6 + $0xe0] sm:$0xff]
    %v119 = vld [vmem:[#allocation6 + $0xe8] sm:$0xff]
    %v120 = vld [vmem:[#allocation6 + $0xf0] sm:$0xff]
    %v121 = vld [vmem:[#allocation6 + $0xf8] sm:$0xff]
    %v122 = vld [vmem:[#allocation6 + $0x100] sm:$0xff]
    %v123 = vld [vmem:[#allocation6 + $0x108] sm:$0xff]
    %v124 = vld [vmem:[#allocation6 + $0x110] sm:$0xff]
    %v125 = vld [vmem:[#allocation6 + $0x118] sm:$0xff]
    %v126 = vld [vmem:[#allocation6 + $0x120] sm:$0xff]
    %v127 = vld [vmem:[#allocation6 + $0x128] sm:$0xff]
    %v128 = vld [vmem:[#allocation6 + $0x130] sm:$0xff]
    %v129 = vld [vmem:[#allocation6 + $0x138] sm:$0xff]
    %v130 = vld [vmem:[#allocation6 + $0x140] sm:$0xff]
    %v131 = vld [vmem:[#allocation6 + $0x148] sm:$0xff]
    %v132 = vld [vmem:[#allocation6 + $0x150] sm:$0xff]
    %v133 = vld [vmem:[#allocation6 + $0x158] sm:$0xff]
    %v134 = vld [vmem:[#allocation6 + $0x160] sm:$0xff]
    %v135 = vld [vmem:[#allocation6 + $0x168] sm:$0xff]
    %v136 = vld [vmem:[#allocation6 + $0x170] sm:$0xff]
    %v137 = vld [vmem:[#allocation6 + $0x178] sm:$0xff]
    %v138 = vld [vmem:[#allocation6 + $0x180] sm:$0xff]
    %v139 = vld [vmem:[#allocation6 + $0x188] sm:$0xff]
    %v140 = vld [vmem:[#allocation6 + $0x190] sm:$0xff]
    %v141 = vld [vmem:[#allocation6 + $0x198] sm:$0xff]
    %v142 = vld [vmem:[#allocation6 + $0x1a0] sm:$0xff]
    %v143 = vld [vmem:[#allocation6 + $0x1a8] sm:$0xff]
    %v144 = vld [vmem:[#allocation6 + $0x1b0] sm:$0xff]
    %v145 = vld [vmem:[#allocation6 + $0x1b8] sm:$0xff]
    %v146 = vld [vmem:[#allocation6 + $0x1c0] sm:$0xff]
    %v147 = vld [vmem:[#allocation6 + $0x1c8] sm:$0xff]
    %v148 = vld [vmem:[#allocation6 + $0x1d0] sm:$0xff]
    %v149 = vld [vmem:[#allocation6 + $0x1d8] sm:$0xff]
    %v150 = vld [vmem:[#allocation6 + $0x1e0] sm:$0xff]
    %v151 = vld [vmem:[#allocation6 + $0x1e8] sm:$0xff]
    %v152 = vld [vmem:[#allocation6 + $0x1f0] sm:$0xff]
    %v153 = vld [vmem:[#allocation6 + $0x1f8] sm:$0xff]
    %v154 = vld [vmem:[#allocation6 + $0x200] sm:$0xff]
    %v155 = vld [vmem:[#allocation6 + $0x208] sm:$0xff]
    %v156 = vld [vmem:[#allocation6 + $0x210] sm:$0xff]
    %v157 = vld [vmem:[#allocation6 + $0x218] sm:$0xff]
    %v158 = vld [vmem:[#allocation6 + $0x220] sm:$0xff]
    %v159 = vld [vmem:[#allocation6 + $0x228] sm:$0xff]
    %v160 = vld [vmem:[#allocation6 + $0x230] sm:$0xff]
    %v161 = vld [vmem:[#allocation6 + $0x238] sm:$0xff]
    %v162 = vld [vmem:[#allocation6 + $0x240] sm:$0xff]
    %v163 = vld [vmem:[#allocation6 + $0x248] sm:$0xff]
    %v164 = vld [vmem:[#allocation6 + $0x250] sm:$0xff]
    %v165 = vld [vmem:[#allocation6 + $0x258] sm:$0xff]
    %v166 = vld [vmem:[#allocation6 + $0x260] sm:$0xff]
    %v167 = vld [vmem:[#allocation6 + $0x268] sm:$0xff]
    %v168 = vld [vmem:[#allocation6 + $0x270] sm:$0xff]
    %v169 = vld [vmem:[#allocation6 + $0x278] sm:$0xff]
    %v170 = vld [vmem:[#allocation6 + $0x280] sm:$0xff]
    %v171 = vld [vmem:[#allocation6 + $0x288] sm:$0xff]
    %v172 = vld [vmem:[#allocation6 + $0x290] sm:$0xff]
    %v173 = vld [vmem:[#allocation6 + $0x298] sm:$0xff]
    %v174 = vld [vmem:[#allocation6 + $0x2a0] sm:$0xff]
    %v175 = vld [vmem:[#allocation6 + $0x2a8] sm:$0xff]
    %v176 = vld [vmem:[#allocation6 + $0x2b0] sm:$0xff]
    %v177 = vld [vmem:[#allocation6 + $0x2b8] sm:$0xff]
    %v178 = vld [vmem:[#allocation6 + $0x2c0] sm:$0xff]
    %v179 = vld [vmem:[#allocation6 + $0x2c8] sm:$0xff]
    %v180 = vld [vmem:[#allocation6 + $0x2d0] sm:$0xff]
    %v181 = vld [vmem:[#allocation6 + $0x2d8] sm:$0xff]
    %v182 = vld [vmem:[#allocation6 + $0x2e0] sm:$0xff]
    %v183 = vld [vmem:[#allocation6 + $0x2e8] sm:$0xff]
    %v184 = vld [vmem:[#allocation6 + $0x2f0] sm:$0xff]
    %v185 = vld [vmem:[#allocation6 + $0x2f8] sm:$0xff]
    %v186 = vld [vmem:[#allocation9] ss:$2 sm:$0x3f]
    %v188 = vperm.slane %v186, 0
    %v189 = vperm.slane %v186, 1
    %v190 = vperm.slane %v186, 2
    %v191 = vperm.slane %v186, 3
    %v192 = vperm.slane %v186, 4
    %v193 = vperm.slane %v186, 5
    %200 = vmatpush.msra.mxu0 %v180
    %201 = vmatpush.msra.mxu0 %v174
    %202 = vmatpush.msra.mxu0 %v168
    %203 = vmatpush.msra.mxu0 %v162
    %204 = vmatpush.msra.mxu0 %v156
    %205 = vmatpush.msra.mxu0 %v150
    %206 = vmatpush.msra.mxu0 %v144
    %207 = vmatpush.msra.mxu0 %v138
    %208 = vmatpush.msra.mxu0 %v132
    %209 = vmatpush.msra.mxu0 %v126
    %210 = vmatpush.msra.mxu0 %v120
    %211 = vmatpush.msra.mxu0 %v114
    %212 = vmatpush.msra.mxu0 %v108
    %213 = vmatpush.msra.mxu0 %v102
    %214 = vmatpush.msra.mxu0 %v96
    %215 = vmatpush.msra.mxu0 %v90
    %216 = vmatmul.f32.gmra.mxu0 %v88
    %v217 = vpop.f32.mrf.mxu0
    %v218 = vadd.f32 %v188, %v217
    %219 = vdwg.mxu0
    %220 = vmatpush.msra.mxu0 %v181
    %221 = vmatpush.msra.mxu0 %v175
    %222 = vmatpush.msra.mxu0 %v169
    %223 = vmatpush.msra.mxu0 %v163
    %224 = vmatpush.msra.mxu0 %v157
    %225 = vmatpush.msra.mxu0 %v151
    %226 = vmatpush.msra.mxu0 %v145
    %227 = vmatpush.msra.mxu0 %v139
    %228 = vmatpush.msra.mxu0 %v133
    %229 = vmatpush.msra.mxu0 %v127
    %230 = vmatpush.msra.mxu0 %v121
    %231 = vmatpush.msra.mxu0 %v115
    %232 = vmatpush.msra.mxu0 %v109
    %233 = vmatpush.msra.mxu0 %v103
    %234 = vmatpush.msra.mxu0 %v97
    %235 = vmatpush.msra.mxu0 %v91
    %236 = vmatmul.f32.gmra.mxu0 %v88
    %v237 = vpop.f32.mrf.mxu0
    %v238 = vadd.f32 %v189, %v237
    %239 = vdwg.mxu0
    %240 = vmatpush.msra.mxu0 %v182
    %241 = vmatpush.msra.mxu0 %v176
    %242 = vmatpush.msra.mxu0 %v170
    %243 = vmatpush.msra.mxu0 %v164
    %244 = vmatpush.msra.mxu0 %v158
    %245 = vmatpush.msra.mxu0 %v152
    %246 = vmatpush.msra.mxu0 %v146
    %247 = vmatpush.msra.mxu0 %v140
    %248 = vmatpush.msra.mxu0 %v134
    %249 = vmatpush.msra.mxu0 %v128
    %250 = vmatpush.msra.mxu0 %v122
    %251 = vmatpush.msra.mxu0 %v116
    %252 = vmatpush.msra.mxu0 %v110
    %253 = vmatpush.msra.mxu0 %v104
    %254 = vmatpush.msra.mxu0 %v98
    %255 = vmatpush.msra.mxu0 %v92
    %256 = vmatmul.f32.gmra.mxu0 %v88
    %v257 = vpop.f32.mrf.mxu0
    %v258 = vadd.f32 %v190, %v257
    %259 = vdwg.mxu0
    %260 = vmatpush.msra.mxu0 %v183
    %261 = vmatpush.msra.mxu0 %v177
    %262 = vmatpush.msra.mxu0 %v171
    %263 = vmatpush.msra.mxu0 %v165
    %264 = vmatpush.msra.mxu0 %v159
    %265 = vmatpush.msra.mxu0 %v153
    %266 = vmatpush.msra.mxu0 %v147
    %267 = vmatpush.msra.mxu0 %v141
    %268 = vmatpush.msra.mxu0 %v135
    %269 = vmatpush.msra.mxu0 %v129
    %270 = vmatpush.msra.mxu0 %v123
    %271 = vmatpush.msra.mxu0 %v117
    %272 = vmatpush.msra.mxu0 %v111
    %273 = vmatpush.msra.mxu0 %v105
    %274 = vmatpush.msra.mxu0 %v99
    %275 = vmatpush.msra.mxu0 %v93
    %276 = vmatmul.f32.gmra.mxu0 %v88
    %v277 = vpop.f32.mrf.mxu0
    %v278 = vadd.f32 %v191, %v277
    %279 = vdwg.mxu0
    %280 = vmatpush.msra.mxu0 %v184
    %281 = vmatpush.msra.mxu0 %v178
    %282 = vmatpush.msra.mxu0 %v172
    %283 = vmatpush.msra.mxu0 %v166
    %284 = vmatpush.msra.mxu0 %v160
    %285 = vmatpush.msra.mxu0 %v154
    %286 = vmatpush.msra.mxu0 %v148
    %287 = vmatpush.msra.mxu0 %v142
    %288 = vmatpush.msra.mxu0 %v136
    %289 = vmatpush.msra.mxu0 %v130
    %290 = vmatpush.msra.mxu0 %v124
    %291 = vmatpush.msra.mxu0 %v118
    %292 = vmatpush.msra.mxu0 %v112
    %293 = vmatpush.msra.mxu0 %v106
    %294 = vmatpush.msra.mxu0 %v100
    %295 = vmatpush.msra.mxu0 %v94
    %296 = vmatmul.f32.gmra.mxu0 %v88
    %v297 = vpop.f32.mrf.mxu0
    %v298 = vadd.f32 %v192, %v297
    %299 = vdwg.mxu0
    %300 = vmatpush.msra.mxu0 %v185
    %301 = vmatpush.msra.mxu0 %v179
    %302 = vmatpush.msra.mxu0 %v173
    %303 = vmatpush.msra.mxu0 %v167
    %304 = vmatpush.msra.mxu0 %v161
    %305 = vmatpush.msra.mxu0 %v155
    %306 = vmatpush.msra.mxu0 %v149
    %307 = vmatpush.msra.mxu0 %v143
    %308 = vmatpush.msra.mxu0 %v137
    %309 = vmatpush.msra.mxu0 %v131
    %310 = vmatpush.msra.mxu0 %v125
    %311 = vmatpush.msra.mxu0 %v119
    %312 = vmatpush.msra.mxu0 %v113
    %313 = vmatpush.msra.mxu0 %v107
    %314 = vmatpush.msra.mxu0 %v101
    %315 = vmatpush.msra.mxu0 %v95
    %316 = vmatmul.f32.gmra.mxu0 %v88
    %v317 = vpop.f32.mrf.mxu0
    %v318 = vadd.f32 %v193, %v317
    %319 = vdwg.mxu0
    %v320 = vld [vmem:[#allocation8] sm:$0xff]
    %v321 = vld [vmem:[#allocation8 + $0x8] sm:$0xff]
    %v322 = vld [vmem:[#allocation8 + $0x10] sm:$0xff]
    %v323 = vld [vmem:[#allocation8 + $0x18] sm:$0xff]
    %v324 = vld [vmem:[#allocation8 + $0x20] sm:$0xff]
    %v325 = vld [vmem:[#allocation8 + $0x28] sm:$0xff]
    %v326 = vld [vmem:[#allocation8 + $0x30] sm:$0xff]
    %v327 = vld [vmem:[#allocation8 + $0x38] sm:$0xff]
    %v328 = vld [vmem:[#allocation8 + $0x40] sm:$0xff]
    %v329 = vld [vmem:[#allocation8 + $0x48] sm:$0xff]
    %v330 = vld [vmem:[#allocation8 + $0x50] sm:$0xff]
    %v331 = vld [vmem:[#allocation8 + $0x58] sm:$0xff]
    %v332 = vld [vmem:[#allocation8 + $0x60] sm:$0xff]
    %v333 = vld [vmem:[#allocation8 + $0x68] sm:$0xff]
    %v334 = vld [vmem:[#allocation8 + $0x70] sm:$0xff]
    %v335 = vld [vmem:[#allocation8 + $0x78] sm:$0xff]
    %v336 = vld [vmem:[#allocation8 + $0x80] sm:$0xff]
    %v337 = vld [vmem:[#allocation8 + $0x88] sm:$0xff]
    %v338 = vld [vmem:[#allocation8 + $0x90] sm:$0xff]
    %v339 = vld [vmem:[#allocation8 + $0x98] sm:$0xff]
    %v340 = vld [vmem:[#allocation8 + $0xa0] sm:$0xff]
    %v341 = vld [vmem:[#allocation8 + $0xa8] sm:$0xff]
    %v342 = vld [vmem:[#allocation8 + $0xb0] sm:$0xff]
    %v343 = vld [vmem:[#allocation8 + $0xb8] sm:$0xff]
    %v344 = vld [vmem:[#allocation8 + $0xc0] sm:$0xff]
    %v345 = vld [vmem:[#allocation8 + $0xc8] sm:$0xff]
    %v346 = vld [vmem:[#allocation8 + $0xd0] sm:$0xff]
    %v347 = vld [vmem:[#allocation8 + $0xd8] sm:$0xff]
    %v348 = vld [vmem:[#allocation8 + $0xe0] sm:$0xff]
    %v349 = vld [vmem:[#allocation8 + $0xe8] sm:$0xff]
    %v350 = vld [vmem:[#allocation8 + $0xf0] sm:$0xff]
    %v351 = vld [vmem:[#allocation8 + $0xf8] sm:$0xff]
    %v352 = vld [vmem:[#allocation8 + $0x100] sm:$0xff]
    %v353 = vld [vmem:[#allocation8 + $0x108] sm:$0xff]
    %v354 = vld [vmem:[#allocation8 + $0x110] sm:$0xff]
    %v355 = vld [vmem:[#allocation8 + $0x118] sm:$0xff]
    %v356 = vld [vmem:[#allocation8 + $0x120] sm:$0xff]
    %v357 = vld [vmem:[#allocation8 + $0x128] sm:$0xff]
    %v358 = vld [vmem:[#allocation8 + $0x130] sm:$0xff]
    %v359 = vld [vmem:[#allocation8 + $0x138] sm:$0xff]
    %v360 = vld [vmem:[#allocation8 + $0x140] sm:$0xff]
    %v361 = vld [vmem:[#allocation8 + $0x148] sm:$0xff]
    %v362 = vld [vmem:[#allocation8 + $0x150] sm:$0xff]
    %v363 = vld [vmem:[#allocation8 + $0x158] sm:$0xff]
    %v364 = vld [vmem:[#allocation8 + $0x160] sm:$0xff]
    %v365 = vld [vmem:[#allocation8 + $0x168] sm:$0xff]
    %v366 = vld [vmem:[#allocation8 + $0x170] sm:$0xff]
    %v367 = vld [vmem:[#allocation8 + $0x178] sm:$0xff]
    %v368 = vld [vmem:[#allocation8 + $0x180] sm:$0xff]
    %v369 = vld [vmem:[#allocation8 + $0x188] sm:$0xff]
    %v370 = vld [vmem:[#allocation8 + $0x190] sm:$0xff]
    %v371 = vld [vmem:[#allocation8 + $0x198] sm:$0xff]
    %v372 = vld [vmem:[#allocation8 + $0x1a0] sm:$0xff]
    %v373 = vld [vmem:[#allocation8 + $0x1a8] sm:$0xff]
    %v374 = vld [vmem:[#allocation8 + $0x1b0] sm:$0xff]
    %v375 = vld [vmem:[#allocation8 + $0x1b8] sm:$0xff]
    %v376 = vld [vmem:[#allocation8 + $0x1c0] sm:$0xff]
    %v377 = vld [vmem:[#allocation8 + $0x1c8] sm:$0xff]
    %v378 = vld [vmem:[#allocation8 + $0x1d0] sm:$0xff]
    %v379 = vld [vmem:[#allocation8 + $0x1d8] sm:$0xff]
    %v380 = vld [vmem:[#allocation8 + $0x1e0] sm:$0xff]
    %v381 = vld [vmem:[#allocation8 + $0x1e8] sm:$0xff]
    %v382 = vld [vmem:[#allocation8 + $0x1f0] sm:$0xff]
    %v383 = vld [vmem:[#allocation8 + $0x1f8] sm:$0xff]
    %v384 = vld [vmem:[#allocation8 + $0x200] sm:$0xff]
    %v385 = vld [vmem:[#allocation8 + $0x208] sm:$0xff]
    %v386 = vld [vmem:[#allocation8 + $0x210] sm:$0xff]
    %v387 = vld [vmem:[#allocation8 + $0x218] sm:$0xff]
    %v388 = vld [vmem:[#allocation8 + $0x220] sm:$0xff]
    %v389 = vld [vmem:[#allocation8 + $0x228] sm:$0xff]
    %v390 = vld [vmem:[#allocation8 + $0x230] sm:$0xff]
    %v391 = vld [vmem:[#allocation8 + $0x238] sm:$0xff]
    %v392 = vld [vmem:[#allocation8 + $0x240] sm:$0xff]
    %v393 = vld [vmem:[#allocation8 + $0x248] sm:$0xff]
    %v394 = vld [vmem:[#allocation8 + $0x250] sm:$0xff]
    %v395 = vld [vmem:[#allocation8 + $0x258] sm:$0xff]
    %v396 = vld [vmem:[#allocation8 + $0x260] sm:$0xff]
    %v397 = vld [vmem:[#allocation8 + $0x268] sm:$0xff]
    %v398 = vld [vmem:[#allocation8 + $0x270] sm:$0xff]
    %v399 = vld [vmem:[#allocation8 + $0x278] sm:$0xff]
    %v400 = vld [vmem:[#allocation8 + $0x280] sm:$0xff]
    %v401 = vld [vmem:[#allocation8 + $0x288] sm:$0xff]
    %v402 = vld [vmem:[#allocation8 + $0x290] sm:$0xff]
    %v403 = vld [vmem:[#allocation8 + $0x298] sm:$0xff]
    %v404 = vld [vmem:[#allocation8 + $0x2a0] sm:$0xff]
    %v405 = vld [vmem:[#allocation8 + $0x2a8] sm:$0xff]
    %v406 = vld [vmem:[#allocation8 + $0x2b0] sm:$0xff]
    %v407 = vld [vmem:[#allocation8 + $0x2b8] sm:$0xff]
    %v408 = vld [vmem:[#allocation8 + $0x2c0] sm:$0xff]
    %v409 = vld [vmem:[#allocation8 + $0x2c8] sm:$0xff]
    %v410 = vld [vmem:[#allocation8 + $0x2d0] sm:$0xff]
    %v411 = vld [vmem:[#allocation8 + $0x2d8] sm:$0xff]
    %v412 = vld [vmem:[#allocation8 + $0x2e0] sm:$0xff]
    %v413 = vld [vmem:[#allocation8 + $0x2e8] sm:$0xff]
    %v414 = vld [vmem:[#allocation8 + $0x2f0] sm:$0xff]
    %v415 = vld [vmem:[#allocation8 + $0x2f8] sm:$0xff]
    %v416 = vld [vmem:[#allocation8 + $0x300] sm:$0xff]
    %v417 = vld [vmem:[#allocation8 + $0x308] sm:$0xff]
    %v418 = vld [vmem:[#allocation8 + $0x310] sm:$0xff]
    %v419 = vld [vmem:[#allocation8 + $0x318] sm:$0xff]
    %v420 = vld [vmem:[#allocation8 + $0x320] sm:$0xff]
    %v421 = vld [vmem:[#allocation8 + $0x328] sm:$0xff]
    %v422 = vld [vmem:[#allocation8 + $0x330] sm:$0xff]
    %v423 = vld [vmem:[#allocation8 + $0x338] sm:$0xff]
    %v424 = vld [vmem:[#allocation8 + $0x340] sm:$0xff]
    %v425 = vld [vmem:[#allocation8 + $0x348] sm:$0xff]
    %v426 = vld [vmem:[#allocation8 + $0x350] sm:$0xff]
    %v427 = vld [vmem:[#allocation8 + $0x358] sm:$0xff]
    %v428 = vld [vmem:[#allocation8 + $0x360] sm:$0xff]
    %v429 = vld [vmem:[#allocation8 + $0x368] sm:$0xff]
    %v430 = vld [vmem:[#allocation8 + $0x370] sm:$0xff]
    %v431 = vld [vmem:[#allocation8 + $0x378] sm:$0xff]
    %v432 = vld [vmem:[#allocation8 + $0x380] sm:$0xff]
    %v433 = vld [vmem:[#allocation8 + $0x388] sm:$0xff]
    %v434 = vld [vmem:[#allocation8 + $0x390] sm:$0xff]
    %v435 = vld [vmem:[#allocation8 + $0x398] sm:$0xff]
    %v436 = vld [vmem:[#allocation8 + $0x3a0] sm:$0xff]
    %v437 = vld [vmem:[#allocation8 + $0x3a8] sm:$0xff]
    %v438 = vld [vmem:[#allocation8 + $0x3b0] sm:$0xff]
    %v439 = vld [vmem:[#allocation8 + $0x3b8] sm:$0xff]
    %v440 = vld [vmem:[#allocation8 + $0x3c0] sm:$0xff]
    %v441 = vld [vmem:[#allocation8 + $0x3c8] sm:$0xff]
    %v442 = vld [vmem:[#allocation8 + $0x3d0] sm:$0xff]
    %v443 = vld [vmem:[#allocation8 + $0x3d8] sm:$0xff]
    %v444 = vld [vmem:[#allocation8 + $0x3e0] sm:$0xff]
    %v445 = vld [vmem:[#allocation8 + $0x3e8] sm:$0xff]
    %v446 = vld [vmem:[#allocation8 + $0x3f0] sm:$0xff]
    %v447 = vld [vmem:[#allocation8 + $0x3f8] sm:$0xff]
    %v448 = vld [vmem:[#allocation8 + $0x400] sm:$0xff]
    %v449 = vld [vmem:[#allocation8 + $0x408] sm:$0xff]
    %v450 = vld [vmem:[#allocation8 + $0x410] sm:$0xff]
    %v451 = vld [vmem:[#allocation8 + $0x418] sm:$0xff]
    %v452 = vld [vmem:[#allocation8 + $0x420] sm:$0xff]
    %v453 = vld [vmem:[#allocation8 + $0x428] sm:$0xff]
    %v454 = vld [vmem:[#allocation8 + $0x430] sm:$0xff]
    %v455 = vld [vmem:[#allocation8 + $0x438] sm:$0xff]
    %v456 = vld [vmem:[#allocation8 + $0x440] sm:$0xff]
    %v457 = vld [vmem:[#allocation8 + $0x448] sm:$0xff]
    %v458 = vld [vmem:[#allocation8 + $0x450] sm:$0xff]
    %v459 = vld [vmem:[#allocation8 + $0x458] sm:$0xff]
    %v460 = vld [vmem:[#allocation8 + $0x460] sm:$0xff]
    %v461 = vld [vmem:[#allocation8 + $0x468] sm:$0xff]
    %v462 = vld [vmem:[#allocation8 + $0x470] sm:$0xff]
    %v463 = vld [vmem:[#allocation8 + $0x478] sm:$0xff]
    %v464 = vld [vmem:[#allocation8 + $0x480] sm:$0xff]
    %v465 = vld [vmem:[#allocation8 + $0x488] sm:$0xff]
    %v466 = vld [vmem:[#allocation8 + $0x490] sm:$0xff]
    %v467 = vld [vmem:[#allocation8 + $0x498] sm:$0xff]
    %v468 = vld [vmem:[#allocation8 + $0x4a0] sm:$0xff]
    %v469 = vld [vmem:[#allocation8 + $0x4a8] sm:$0xff]
    %v470 = vld [vmem:[#allocation8 + $0x4b0] sm:$0xff]
    %v471 = vld [vmem:[#allocation8 + $0x4b8] sm:$0xff]
    %v472 = vld [vmem:[#allocation8 + $0x4c0] sm:$0xff]
    %v473 = vld [vmem:[#allocation8 + $0x4c8] sm:$0xff]
    %v474 = vld [vmem:[#allocation8 + $0x4d0] sm:$0xff]
    %v475 = vld [vmem:[#allocation8 + $0x4d8] sm:$0xff]
    %v476 = vld [vmem:[#allocation8 + $0x4e0] sm:$0xff]
    %v477 = vld [vmem:[#allocation8 + $0x4e8] sm:$0xff]
    %v478 = vld [vmem:[#allocation8 + $0x4f0] sm:$0xff]
    %v479 = vld [vmem:[#allocation8 + $0x4f8] sm:$0xff]
    %v480 = vld [vmem:[#allocation8 + $0x500] sm:$0xff]
    %v481 = vld [vmem:[#allocation8 + $0x508] sm:$0xff]
    %v482 = vld [vmem:[#allocation8 + $0x510] sm:$0xff]
    %v483 = vld [vmem:[#allocation8 + $0x518] sm:$0xff]
    %v484 = vld [vmem:[#allocation8 + $0x520] sm:$0xff]
    %v485 = vld [vmem:[#allocation8 + $0x528] sm:$0xff]
    %v486 = vld [vmem:[#allocation8 + $0x530] sm:$0xff]
    %v487 = vld [vmem:[#allocation8 + $0x538] sm:$0xff]
    %v488 = vld [vmem:[#allocation8 + $0x540] sm:$0xff]
    %v489 = vld [vmem:[#allocation8 + $0x548] sm:$0xff]
    %v490 = vld [vmem:[#allocation8 + $0x550] sm:$0xff]
    %v491 = vld [vmem:[#allocation8 + $0x558] sm:$0xff]
    %v492 = vld [vmem:[#allocation8 + $0x560] sm:$0xff]
    %v493 = vld [vmem:[#allocation8 + $0x568] sm:$0xff]
    %v494 = vld [vmem:[#allocation8 + $0x570] sm:$0xff]
    %v495 = vld [vmem:[#allocation8 + $0x578] sm:$0xff]
    %v496 = vld [vmem:[#allocation8 + $0x580] sm:$0xff]
    %v497 = vld [vmem:[#allocation8 + $0x588] sm:$0xff]
    %v498 = vld [vmem:[#allocation8 + $0x590] sm:$0xff]
    %v499 = vld [vmem:[#allocation8 + $0x598] sm:$0xff]
    %v500 = vld [vmem:[#allocation8 + $0x5a0] sm:$0xff]
    %v501 = vld [vmem:[#allocation8 + $0x5a8] sm:$0xff]
    %v502 = vld [vmem:[#allocation8 + $0x5b0] sm:$0xff]
    %v503 = vld [vmem:[#allocation8 + $0x5b8] sm:$0xff]
    %v504 = vld [vmem:[#allocation8 + $0x5c0] sm:$0xff]
    %v505 = vld [vmem:[#allocation8 + $0x5c8] sm:$0xff]
    %v506 = vld [vmem:[#allocation8 + $0x5d0] sm:$0xff]
    %v507 = vld [vmem:[#allocation8 + $0x5d8] sm:$0xff]
    %v508 = vld [vmem:[#allocation8 + $0x5e0] sm:$0xff]
    %v509 = vld [vmem:[#allocation8 + $0x5e8] sm:$0xff]
    %v510 = vld [vmem:[#allocation8 + $0x5f0] sm:$0xff]
    %v511 = vld [vmem:[#allocation8 + $0x5f8] sm:$0xff]
    %s512 = scalar_lea.vmem [#allocation9], 1
    %v513 = vld [vmem:[%s512] ss:$2 sm:$0x3f]
    %v515 = vperm.slane %v89, 0
    %v516 = vperm.slane %v89, 1
    %v520 = vperm.slane %v513, 0
    %v521 = vperm.slane %v513, 1
    %v522 = vperm.slane %v513, 2
    %v523 = vperm.slane %v513, 3
    %v524 = vperm.slane %v513, 4
    %v525 = vperm.slane %v513, 5
    %532 = vmatpush.msra.mxu0 %v410
    %533 = vmatpush.msra.mxu0 %v404
    %534 = vmatpush.msra.mxu0 %v398
    %535 = vmatpush.msra.mxu0 %v392
    %536 = vmatpush.msra.mxu0 %v386
    %537 = vmatpush.msra.mxu0 %v380
    %538 = vmatpush.msra.mxu0 %v374
    %539 = vmatpush.msra.mxu0 %v368
    %540 = vmatpush.msra.mxu0 %v362
    %541 = vmatpush.msra.mxu0 %v356
    %542 = vmatpush.msra.mxu0 %v350
    %543 = vmatpush.msra.mxu0 %v344
    %544 = vmatpush.msra.mxu0 %v338
    %545 = vmatpush.msra.mxu0 %v332
    %546 = vmatpush.msra.mxu0 %v326
    %547 = vmatpush.msra.mxu0 %v320
    %548 = vmatmul.f32.gmra.mxu0 %v515
    %v549 = vpop.f32.mrf.mxu0
    %v550 = vadd.f32 %v520, %v549
    %551 = vdwg.mxu0
    %552 = vmatpush.msra.mxu0 %v506
    %553 = vmatpush.msra.mxu0 %v500
    %554 = vmatpush.msra.mxu0 %v494
    %555 = vmatpush.msra.mxu0 %v488
    %556 = vmatpush.msra.mxu0 %v482
    %557 = vmatpush.msra.mxu0 %v476
    %558 = vmatpush.msra.mxu0 %v470
    %559 = vmatpush.msra.mxu0 %v464
    %560 = vmatpush.msra.mxu0 %v458
    %561 = vmatpush.msra.mxu0 %v452
    %562 = vmatpush.msra.mxu0 %v446
    %563 = vmatpush.msra.mxu0 %v440
    %564 = vmatpush.msra.mxu0 %v434
    %565 = vmatpush.msra.mxu0 %v428
    %566 = vmatpush.msra.mxu0 %v422
    %567 = vmatpush.msra.mxu0 %v416
    %568 = vmatmul.f32.gmra.mxu0 %v516
    %v569 = vpop.f32.mrf.mxu0
    %v570 = vadd.f32 %v550, %v569
    %571 = vdwg.mxu0
    %572 = vmatpush.msra.mxu0 %v411
    %573 = vmatpush.msra.mxu0 %v405
    %574 = vmatpush.msra.mxu0 %v399
    %575 = vmatpush.msra.mxu0 %v393
    %576 = vmatpush.msra.mxu0 %v387
    %577 = vmatpush.msra.mxu0 %v381
    %578 = vmatpush.msra.mxu0 %v375
    %579 = vmatpush.msra.mxu0 %v369
    %580 = vmatpush.msra.mxu0 %v363
    %581 = vmatpush.msra.mxu0 %v357
    %582 = vmatpush.msra.mxu0 %v351
    %583 = vmatpush.msra.mxu0 %v345
    %584 = vmatpush.msra.mxu0 %v339
    %585 = vmatpush.msra.mxu0 %v333
    %586 = vmatpush.msra.mxu0 %v327
    %587 = vmatpush.msra.mxu0 %v321
    %588 = vmatmul.f32.gmra.mxu0 %v515
    %v589 = vpop.f32.mrf.mxu0
    %v590 = vadd.f32 %v521, %v589
    %591 = vdwg.mxu0
    %592 = vmatpush.msra.mxu0 %v507
    %593 = vmatpush.msra.mxu0 %v501
    %594 = vmatpush.msra.mxu0 %v495
    %595 = vmatpush.msra.mxu0 %v489
    %596 = vmatpush.msra.mxu0 %v483
    %597 = vmatpush.msra.mxu0 %v477
    %598 = vmatpush.msra.mxu0 %v471
    %599 = vmatpush.msra.mxu0 %v465
    %600 = vmatpush.msra.mxu0 %v459
    %601 = vmatpush.msra.mxu0 %v453
    %602 = vmatpush.msra.mxu0 %v447
    %603 = vmatpush.msra.mxu0 %v441
    %604 = vmatpush.msra.mxu0 %v435
    %605 = vmatpush.msra.mxu0 %v429
    %606 = vmatpush.msra.mxu0 %v423
    %607 = vmatpush.msra.mxu0 %v417
    %608 = vmatmul.f32.gmra.mxu0 %v516
    %v609 = vpop.f32.mrf.mxu0
    %v610 = vadd.f32 %v590, %v609
    %611 = vdwg.mxu0
    %612 = vmatpush.msra.mxu0 %v412
    %613 = vmatpush.msra.mxu0 %v406
    %614 = vmatpush.msra.mxu0 %v400
    %615 = vmatpush.msra.mxu0 %v394
    %616 = vmatpush.msra.mxu0 %v388
    %617 = vmatpush.msra.mxu0 %v382
    %618 = vmatpush.msra.mxu0 %v376
    %619 = vmatpush.msra.mxu0 %v370
    %620 = vmatpush.msra.mxu0 %v364
    %621 = vmatpush.msra.mxu0 %v358
    %622 = vmatpush.msra.mxu0 %v352
    %623 = vmatpush.msra.mxu0 %v346
    %624 = vmatpush.msra.mxu0 %v340
    %625 = vmatpush.msra.mxu0 %v334
    %626 = vmatpush.msra.mxu0 %v328
    %627 = vmatpush.msra.mxu0 %v322
    %628 = vmatmul.f32.gmra.mxu0 %v515
    %v629 = vpop.f32.mrf.mxu0
    %v630 = vadd.f32 %v522, %v629
    %631 = vdwg.mxu0
    %632 = vmatpush.msra.mxu0 %v508
    %633 = vmatpush.msra.mxu0 %v502
    %634 = vmatpush.msra.mxu0 %v496
    %635 = vmatpush.msra.mxu0 %v490
    %636 = vmatpush.msra.mxu0 %v484
    %637 = vmatpush.msra.mxu0 %v478
    %638 = vmatpush.msra.mxu0 %v472
    %639 = vmatpush.msra.mxu0 %v466
    %640 = vmatpush.msra.mxu0 %v460
    %641 = vmatpush.msra.mxu0 %v454
    %642 = vmatpush.msra.mxu0 %v448
    %643 = vmatpush.msra.mxu0 %v442
    %644 = vmatpush.msra.mxu0 %v436
    %645 = vmatpush.msra.mxu0 %v430
    %646 = vmatpush.msra.mxu0 %v424
    %647 = vmatpush.msra.mxu0 %v418
    %648 = vmatmul.f32.gmra.mxu0 %v516
    %v649 = vpop.f32.mrf.mxu0
    %v650 = vadd.f32 %v630, %v649
    %651 = vdwg.mxu0
    %652 = vmatpush.msra.mxu0 %v413
    %653 = vmatpush.msra.mxu0 %v407
    %654 = vmatpush.msra.mxu0 %v401
    %655 = vmatpush.msra.mxu0 %v395
    %656 = vmatpush.msra.mxu0 %v389
    %657 = vmatpush.msra.mxu0 %v383
    %658 = vmatpush.msra.mxu0 %v377
    %659 = vmatpush.msra.mxu0 %v371
    %660 = vmatpush.msra.mxu0 %v365
    %661 = vmatpush.msra.mxu0 %v359
    %662 = vmatpush.msra.mxu0 %v353
    %663 = vmatpush.msra.mxu0 %v347
    %664 = vmatpush.msra.mxu0 %v341
    %665 = vmatpush.msra.mxu0 %v335
    %666 = vmatpush.msra.mxu0 %v329
    %667 = vmatpush.msra.mxu0 %v323
    %668 = vmatmul.f32.gmra.mxu0 %v515
    %v669 = vpop.f32.mrf.mxu0
    %v670 = vadd.f32 %v523, %v669
    %671 = vdwg.mxu0
    %672 = vmatpush.msra.mxu0 %v509
    %673 = vmatpush.msra.mxu0 %v503
    %674 = vmatpush.msra.mxu0 %v497
    %675 = vmatpush.msra.mxu0 %v491
    %676 = vmatpush.msra.mxu0 %v485
    %677 = vmatpush.msra.mxu0 %v479
    %678 = vmatpush.msra.mxu0 %v473
    %679 = vmatpush.msra.mxu0 %v467
    %680 = vmatpush.msra.mxu0 %v461
    %681 = vmatpush.msra.mxu0 %v455
    %682 = vmatpush.msra.mxu0 %v449
    %683 = vmatpush.msra.mxu0 %v443
    %684 = vmatpush.msra.mxu0 %v437
    %685 = vmatpush.msra.mxu0 %v431
    %686 = vmatpush.msra.mxu0 %v425
    %687 = vmatpush.msra.mxu0 %v419
    %688 = vmatmul.f32.gmra.mxu0 %v516
    %v689 = vpop.f32.mrf.mxu0
    %v690 = vadd.f32 %v670, %v689
    %691 = vdwg.mxu0
    %692 = vmatpush.msra.mxu0 %v414
    %693 = vmatpush.msra.mxu0 %v408
    %694 = vmatpush.msra.mxu0 %v402
    %695 = vmatpush.msra.mxu0 %v396
    %696 = vmatpush.msra.mxu0 %v390
    %697 = vmatpush.msra.mxu0 %v384
    %698 = vmatpush.msra.mxu0 %v378
    %699 = vmatpush.msra.mxu0 %v372
    %700 = vmatpush.msra.mxu0 %v366
    %701 = vmatpush.msra.mxu0 %v360
    %702 = vmatpush.msra.mxu0 %v354
    %703 = vmatpush.msra.mxu0 %v348
    %704 = vmatpush.msra.mxu0 %v342
    %705 = vmatpush.msra.mxu0 %v336
    %706 = vmatpush.msra.mxu0 %v330
    %707 = vmatpush.msra.mxu0 %v324
    %708 = vmatmul.f32.gmra.mxu0 %v515
    %v709 = vpop.f32.mrf.mxu0
    %v710 = vadd.f32 %v524, %v709
    %711 = vdwg.mxu0
    %712 = vmatpush.msra.mxu0 %v510
    %713 = vmatpush.msra.mxu0 %v504
    %714 = vmatpush.msra.mxu0 %v498
    %715 = vmatpush.msra.mxu0 %v492
    %716 = vmatpush.msra.mxu0 %v486
    %717 = vmatpush.msra.mxu0 %v480
    %718 = vmatpush.msra.mxu0 %v474
    %719 = vmatpush.msra.mxu0 %v468
    %720 = vmatpush.msra.mxu0 %v462
    %721 = vmatpush.msra.mxu0 %v456
    %722 = vmatpush.msra.mxu0 %v450
    %723 = vmatpush.msra.mxu0 %v444
    %724 = vmatpush.msra.mxu0 %v438
    %725 = vmatpush.msra.mxu0 %v432
    %726 = vmatpush.msra.mxu0 %v426
    %727 = vmatpush.msra.mxu0 %v420
    %728 = vmatmul.f32.gmra.mxu0 %v516
    %v729 = vpop.f32.mrf.mxu0
    %v730 = vadd.f32 %v710, %v729
    %731 = vdwg.mxu0
    %732 = vmatpush.msra.mxu0 %v415
    %733 = vmatpush.msra.mxu0 %v409
    %734 = vmatpush.msra.mxu0 %v403
    %735 = vmatpush.msra.mxu0 %v397
    %736 = vmatpush.msra.mxu0 %v391
    %737 = vmatpush.msra.mxu0 %v385
    %738 = vmatpush.msra.mxu0 %v379
    %739 = vmatpush.msra.mxu0 %v373
    %740 = vmatpush.msra.mxu0 %v367
    %741 = vmatpush.msra.mxu0 %v361
    %742 = vmatpush.msra.mxu0 %v355
    %743 = vmatpush.msra.mxu0 %v349
    %744 = vmatpush.msra.mxu0 %v343
    %745 = vmatpush.msra.mxu0 %v337
    %746 = vmatpush.msra.mxu0 %v331
    %747 = vmatpush.msra.mxu0 %v325
    %748 = vmatmul.f32.gmra.mxu0 %v515
    %v749 = vpop.f32.mrf.mxu0
    %v750 = vadd.f32 %v525, %v749
    %751 = vdwg.mxu0
    %752 = vmatpush.msra.mxu0 %v511
    %753 = vmatpush.msra.mxu0 %v505
    %754 = vmatpush.msra.mxu0 %v499
    %755 = vmatpush.msra.mxu0 %v493
    %756 = vmatpush.msra.mxu0 %v487
    %757 = vmatpush.msra.mxu0 %v481
    %758 = vmatpush.msra.mxu0 %v475
    %759 = vmatpush.msra.mxu0 %v469
    %760 = vmatpush.msra.mxu0 %v463
    %761 = vmatpush.msra.mxu0 %v457
    %762 = vmatpush.msra.mxu0 %v451
    %763 = vmatpush.msra.mxu0 %v445
    %764 = vmatpush.msra.mxu0 %v439
    %765 = vmatpush.msra.mxu0 %v433
    %766 = vmatpush.msra.mxu0 %v427
    %767 = vmatpush.msra.mxu0 %v421
    %768 = vmatmul.f32.gmra.mxu0 %v516
    %v769 = vpop.f32.mrf.mxu0
    %v770 = vadd.f32 %v750, %v769
    %771 = vdwg.mxu0
    %v772 = vadd.f32 %v218, %v570
    %v773 = vxor.u32 %v772, 2147483648
    %v774 = vmul.f32 %v773, 1.442695
    %v775 = vpow.pop %v774
    %v776 = vadd.f32 %v775, 1.0
    %v777 = vrcp.pop %v776
    %v778 = vmul.f32 %v776, %v777
    %v779 = vsub.f32 1.0, %v778
    %v780 = vmul.f32 %v777, %v779
    %v781 = vadd.f32 %v777, %v780
    %vm782 = vweird.f32 %v776
    %vm783 = vweird.f32 %v777
    %vm784 = vmor %vm782, %vm783
    %v785 = vsel %vm784, %v777, %v781
    %v786 = vand.u32 2147483647, %v776
    %vm787 = vcmp.eq.f32.partialorder %v786, 8.507059e+37
    %v788 = vand.u32 %v776, 2147483648
    %v789 = vor.u32 1.1754944e-38, %v788
    %v790 = vsel %vm787, %v789, %v785
    %v791 = vmul.f32 1.0, %v790
    %v792 = vadd.f32 %v238, %v610
    %v793 = vxor.u32 %v792, 2147483648
    %v794 = vmul.f32 %v793, 1.442695
    %v795 = vpow.pop %v794
    %v796 = vadd.f32 %v795, 1.0
    %v797 = vrcp.pop %v796
    %v798 = vmul.f32 %v796, %v797
    %v799 = vsub.f32 1.0, %v798
    %v800 = vmul.f32 %v797, %v799
    %v801 = vadd.f32 %v797, %v800
    %vm802 = vweird.f32 %v796
    %vm803 = vweird.f32 %v797
    %vm804 = vmor %vm802, %vm803
    %v805 = vsel %vm804, %v797, %v801
    %v806 = vand.u32 2147483647, %v796
    %vm807 = vcmp.eq.f32.partialorder %v806, 8.507059e+37
    %v808 = vand.u32 %v796, 2147483648
    %v809 = vor.u32 1.1754944e-38, %v808
    %v810 = vsel %vm807, %v809, %v805
    %v811 = vmul.f32 1.0, %v810
    %v812 = vmul.f32 %v791, %v650
    %v813 = vadd.f32 %v258, %v812
    %v814 = vtanh.pop %v813
    %v815 = vsub.f32 1.0, %v811
    %v816 = vmul.f32 %v815, %v814
    %v817 = vmul.f32 %v811, %v89
    %v818 = vadd.f32 %v816, %v817
    %v819 = vlaneseq
    %vm820 = vcmp.ge.s32.totalorder %v819, 0
    %vm821 = vcmp.lt.s32.totalorder %v819, 128
    %vm822 = vmand %vm820, %vm821
    %823 = vst.msk [vmem:[#allocation11] sm:$0x1] %vm822, %v818
    %v824 = vadd.f32 %v278, %v690
    %v825 = vxor.u32 %v824, 2147483648
    %v826 = vmul.f32 %v825, 1.442695
    %v827 = vpow.pop %v826
    %v828 = vadd.f32 %v827, 1.0
    %v829 = vrcp.pop %v828
    %v830 = vmul.f32 %v828, %v829
    %v831 = vsub.f32 1.0, %v830
    %v832 = vmul.f32 %v829, %v831
    %v833 = vadd.f32 %v829, %v832
    %vm834 = vweird.f32 %v828
    %vm835 = vweird.f32 %v829
    %vm836 = vmor %vm834, %vm835
    %v837 = vsel %vm836, %v829, %v833
    %v838 = vand.u32 2147483647, %v828
    %vm839 = vcmp.eq.f32.partialorder %v838, 8.507059e+37
    %v840 = vand.u32 %v828, 2147483648
    %v841 = vor.u32 1.1754944e-38, %v840
    %v842 = vsel %vm839, %v841, %v837
    %v843 = vmul.f32 1.0, %v842
    %v844 = vadd.f32 %v298, %v730
    %v845 = vxor.u32 %v844, 2147483648
    %v846 = vmul.f32 %v845, 1.442695
    %v847 = vpow.pop %v846
    %v848 = vadd.f32 %v847, 1.0
    %v849 = vrcp.pop %v848
    %v850 = vmul.f32 %v848, %v849
    %v851 = vsub.f32 1.0, %v850
    %v852 = vmul.f32 %v849, %v851
    %v853 = vadd.f32 %v849, %v852
    %vm854 = vweird.f32 %v848
    %vm855 = vweird.f32 %v849
    %vm856 = vmor %vm854, %vm855
    %v857 = vsel %vm856, %v849, %v853
    %v858 = vand.u32 2147483647, %v848
    %vm859 = vcmp.eq.f32.partialorder %v858, 8.507059e+37
    %v860 = vand.u32 %v848, 2147483648
    %v861 = vor.u32 1.1754944e-38, %v860
    %v862 = vsel %vm859, %v861, %v857
    %v863 = vmul.f32 1.0, %v862
    %v864 = vmul.f32 %v843, %v770
    %v865 = vadd.f32 %v318, %v864
    %v866 = vtanh.pop %v865
    %v867 = vsub.f32 1.0, %v863
    %v868 = vmul.f32 %v867, %v866
    %v869 = vmul.f32 %v863, %v516
    %v870 = vadd.f32 %v868, %v869
    %871 = vst.msk [vmem:[#allocation11 + $0x1] sm:$0x1] %vm822, %v870
    // Predicated region
    $region42: #{bigru_step.1} parent=1 // pred_check
      _
    $region43: #{bigru_step.1} parent=1 // pred_check_branch
      %873 = sbr.rel (0) target = $region45
    $region44: #{bigru_step.1} parent=1 // pred_region
      %875 = vsyncadd [#allocation5], 0
      %s877 = sshll.u32 [#allocation11], 4
      %s878 = int_to_ptr.vmem [resolvable:$true] %s877
      %s879 = sshll.u32 %s6, 4
      %s880 = int_to_ptr.hbm [resolvable:$true] %s879
      %882 = dma.vmem_to_hbm [thread:$0]  %s878, 32, %s880, [#allocation5]
    $region45: #{bigru_step.1} parent=1 // pred_fallthru
      _
    // Predicated region
    $region46: #{bigru_step.1} parent=1 // pred_check
      _
    $region47: #{bigru_step.1} parent=1 // pred_check_branch
      %884 = sbr.rel (0) target = $region49
    $region48: #{bigru_step.1} parent=1 // pred_region
      %886 = dma.done [#allocation5], 32
    $region49: #{bigru_step.1} parent=1 // pred_fallthru
      _
    %887 = vsyncpa [#allocation4], 1
    %888 = vsyncpa [#allocation7], 1
    %889 = vsyncpa [#allocation10], 1
    %890 = vsyncpa [#allocation5], 1

</llo_original>
